<compile_context>
chip_gen: v7x
topology: tpu7x:2x2x1
jax: 0.10.0
libtpu: 0.0.40
codegen_flags: <defaults>
</compile_context>

<pallas_src>
import functools

import jax
import jax.numpy as jnp
from jax.experimental import pallas as pl
from jax.experimental.pallas import tpu as pltpu


def _round_up(x, m):
    return (x + m - 1) // m * m


def _vmem_capacity_bytes(default=64 * 1024 * 1024):
    """Physical VMEM of the attached TPU; falls back to the smallest (v7x) size."""
    try:
        info = pltpu.get_tpu_info()
        return int(getattr(info, "vmem_capacity_bytes", default))
    except Exception:
        return default


def _recon_adj_kernel(x_ref, w_ref, b_ref, a_ref, *, d, dp):
    # x_ref: (Bb*N, D)   flattened embeddings for Bb batch elements.
    # w_ref: (D, 2*Dp)   fused [Wq^T | pad | Wk^T | pad], halves padded to Dp lanes.
    # b_ref: (1, 2*Dp)   fused [bq | pad | bk | pad].
    # a_ref: (Bb, N, N)  adjacency output block.
    bb, n, _ = a_ref.shape

    x = x_ref[...]                                                  # (Bb*N, D)

    # One fused matmul produces Q and K (weights stay VMEM-resident).
    qk = jnp.dot(x, w_ref[...],
                 preferred_element_type=jnp.float32) + b_ref[...]  # (Bb*N, 2*Dp)

    # Both slices start on a 128-lane tile boundary (lane 0 and lane Dp), so no
    # cross-lane relayout of the K half is needed even when D % 128 != 0.
    q = qk[:, :d].reshape(bb, n, d)                                 # (Bb, N, D)
    k = qk[:, dp:dp + d].reshape(bb, n, d)                          # (Bb, N, D)

    # A[b] = q[b] @ k[b]^T : contract last dims of both operands, batched over
    # the block, so k^T is never materialized (no XLU transpose round-trip).
    a = jax.lax.dot_general(
        q, k,
        dimension_numbers=(((2,), (2,)), ((0,), (0,))),             # 'bid,bjd->bij'
        preferred_element_type=jnp.float32,
    )

    # TODO(synk): for N < 128 this store is lane-masked (vst.msk). If profiling
    # shows the store slot saturating (v5e especially), relayout so block_b*N
    # sits on the lane dim before the store and undo it with a free wrapper
    # reshape; byte-budget block sizing at least keeps the narrow stores
    # pipelined.
    a_ref[...] = a.astype(a_ref.dtype)

    # TODO(synk): the PyTorch module also builds `msk` via topk/softmax/scatter,
    # but `msk` is unused and only A is returned, so that block is omitted.


def _block_vmem_bytes(bb, n, d, dp, itemsize):
    """Rough per-step VMEM footprint for a batch block of size bb."""
    rows = bb * n
    in_bytes = rows * d * itemsize           # emb block
    out_bytes = bb * n * n * itemsize        # A block
    qk_bytes = rows * 2 * dp * 4             # fused projection intermediate (f32)
    qk_halves = 2 * rows * d * 4             # q / k values (f32)
    a_val = bb * n * n * 4                   # f32 A before cast/store
    w_bytes = d * 2 * dp * 4 + 2 * dp * 4    # resident weights + bias
    # BlockSpec double-buffers the streamed input and output blocks.
    return 2 * in_bytes + 2 * out_bytes + qk_bytes + qk_halves + a_val + w_bytes


def _pick_block_b(batch, n, d, dp, itemsize, vmem_budget_bytes,
                  io_target_bytes=8 * 1024 * 1024):
    """Largest batch block that (a) divides `batch`, (b) keeps the flattened emb
    block 8-sublane aligned, (c) fits the per-step VMEM budget, (d) keeps the
    streamed (input + output) bytes per step in the low-MiB range, and
    (e) leaves >= 2 grid steps when batch >= 2 (so v7x megacore gets both TCs
    busy)."""
    divisors = [x for x in range(1, batch + 1) if batch % x == 0]

    def aligned(bb):
        return (bb * n) % 8 == 0 or bb == batch   # full-array block is always legal

    def fits(bb):
        return _block_vmem_bytes(bb, n, d, dp, itemsize) <= vmem_budget_bytes

    def io_ok(bb):
        return bb * n * (d + n) * itemsize <= io_target_bytes

    def multi_step(bb):
        return batch < 2 or bb <= batch // 2

    for constraints in (
        (aligned, fits, io_ok, multi_step),   # preferred: everything satisfied
        (aligned, fits, multi_step),          # allow bigger-than-target IO blocks
        (aligned, fits),                      # last resort: a single grid step
    ):
        cands = [bb for bb in divisors if all(c(bb) for c in constraints)]
        if cands:
            return max(cands)
    raise ValueError(
        "No batch block fits the VMEM budget; a single (1, N, N) output block "
        "is already too large. TODO(synk): tile the (N, N) output over a second "
        "grid axis (row-blocked q, resident k) for very large N.")


def fuse_qk_params(wq, bq, wk, bk):
    """Fuse Qnet/Knet into one (D, 2*Dp) weight slab and (1, 2*Dp) bias, padding
    each half to a 128-lane boundary so the in-kernel q/k slices are
    tile-aligned. Call ONCE at parameter-load time (hoisted out of the
    per-forward wrapper)."""
    d = wq.shape[0]
    dp = _round_up(d, 128)
    dtype = wq.dtype
    w = jnp.zeros((d, 2 * dp), dtype)
    w = w.at[:, :d].set(wq.T).at[:, dp:dp + d].set(wk.T)
    b = jnp.zeros((1, 2 * dp), dtype)
    b = b.at[0, :d].set(bq).at[0, dp:dp + d].set(bk)
    return w, b


def reconstruc_adj_net(emb, w_qk, b_qk, *, block_b=None, interpret=False):
    """Forward pass of ReconstrucAdjNet.

    emb: [B, N, D]; (w_qk, b_qk) from fuse_qk_params(). Returns A: [B, N, N]."""
    B, N, D = emb.shape
    two_dp = w_qk.shape[1]
    Dp = two_dp // 2
    itemsize = jnp.dtype(emb.dtype).itemsize

    # Per-generation VMEM budget: raise the scoped limit (defaults are only
    # 16/32 MiB) while staying well inside physical capacity
    # (128 MiB v5e/v6e -> ~96 MiB; 64 MiB v7x -> ~48 MiB).
    vmem_cap = _vmem_capacity_bytes()
    vmem_limit = min(int(vmem_cap * 3 // 4), 100 * 1024 * 1024)

    if block_b is None:
        block_b = _pick_block_b(B, N, D, Dp, itemsize,
                                vmem_budget_bytes=int(vmem_limit * 0.9))
    assert B % block_b == 0, (B, block_b)

    # Flatten (B, N, D) -> (B*N, D) in the wrapper (contiguous, free in XLA) so
    # the kernel runs one big 2-D matmul per grid step.
    emb_flat = emb.reshape(B * N, D)
    grid = (B // block_b,)

    cost = pl.CostEstimate(
        flops=2 * B * N * D * (2 * Dp) + 2 * B * N * N * D,
        transcendentals=0,
        bytes_accessed=(emb.size + w_qk.size + b_qk.size + B * N * N) * itemsize,
    )

    kernel = functools.partial(_recon_adj_kernel, d=D, dp=Dp)

    return pl.pallas_call(
        kernel,
        out_shape=jax.ShapeDtypeStruct((B, N, N), emb.dtype),
        grid_spec=pltpu.PrefetchScalarGridSpec(
            num_scalar_prefetch=0,
            grid=grid,
            in_specs=[
                # (block_b*N, D) slab of flattened embeddings per step.
                # (If profiling shows exposed input DMA on v5e/v6e, try
                #  pipeline_mode=pl.Buffered(3) here — costs one extra buffer.)
                pl.BlockSpec((block_b * N, D), lambda b: (b, 0)),
                # Fused, lane-padded weights / bias: same block every step ->
                # VMEM-resident.
                pl.BlockSpec((D, two_dp), lambda b: (0, 0)),
                pl.BlockSpec((1, two_dp), lambda b: (0, 0)),
            ],
            # TODO(synk): once a single (1, N, N) f32 block no longer fits the
            # VMEM budget (N ~ 3k on v7x), tile the (N, N) output over a second
            # grid axis (row-blocked q, resident k) instead of shrinking block_b.
            out_specs=pl.BlockSpec((block_b, N, N), lambda b: (b, 0, 0)),
        ),
        compiler_params=pltpu.CompilerParams(
            dimension_semantics=("parallel",),
            vmem_limit_bytes=vmem_limit,
        ),
        cost_estimate=cost,
        interpret=interpret,
    )(emb_flat, w_qk, b_qk)


if __name__ == "__main__":
    B, N, D = 2, 16, 32   # indim = D

    key = jax.random.PRNGKey(0)
    k_emb, k_wq, k_bq, k_wk, k_bk = jax.random.split(key, 5)

    # Deterministic parameter init (PyTorch Linear default: U(-1/sqrt(in), 1/sqrt(in)))
    bound = 1.0 / (D ** 0.5)
    emb = jax.random.normal(k_emb, (B, N, D), dtype=jnp.float32)
    wq = jax.random.uniform(k_wq, (D, D), minval=-bound, maxval=bound, dtype=jnp.float32)
    bq = jax.random.uniform(k_bq, (D,), minval=-bound, maxval=bound, dtype=jnp.float32)
    wk = jax.random.uniform(k_wk, (D, D), minval=-bound, maxval=bound, dtype=jnp.float32)
    bk = jax.random.uniform(k_bk, (D,), minval=-bound, maxval=bound, dtype=jnp.float32)

    # One-time parameter fusion (hoisted out of the per-forward path).
    w_qk, b_qk = fuse_qk_params(wq, bq, wk, bk)

    A = reconstruc_adj_net(emb, w_qk, b_qk)
    A = jax.block_until_ready(A)

    # Plain-JAX reference check.
    q_ref = emb @ wq.T + bq
    k_ref = emb @ wk.T + bk
    A_ref = jnp.einsum("bik,bjk->bij", q_ref, k_ref)
    assert A.shape == (B, N, N)
    assert jnp.allclose(A, A_ref, atol=1e-4, rtol=1e-4)

    print("KERNEL_OK")
</pallas_src>

<mosaic_0001>
module attributes {stable_mosaic.version = 11 : i64} {
  func.func @_recon_adj_kernel(%arg0: i32, %arg1: memref<16x32xf32, #tpu.memory_space<vmem>>, %arg2: memref<32x256xf32, #tpu.memory_space<vmem>>, %arg3: memref<1x256xf32, #tpu.memory_space<vmem>>, %arg4: memref<1x16x16xf32, #tpu.memory_space<vmem>>) attributes {dimension_semantics = [#tpu.dimension_semantics<parallel>], iteration_bounds = array<i64: 2>, scalar_prefetch = 0 : i64, scratch_operands = 0 : i64, tpu.core_type = #tpu.core_type<tc>, window_params = [{transform_indices = @transform_0, window_bounds = array<i64: 16, 32>}, {pipeline_mode = #tpu.pipeline_mode<synchronous>, transform_indices = @transform_1, window_bounds = array<i64: 32, 256>}, {pipeline_mode = #tpu.pipeline_mode<synchronous>, transform_indices = @transform_2, window_bounds = array<i64: 1, 256>}, {transform_indices = @transform_3, window_bounds = array<i64: 1, 16, 16>}]} {
    %c0 = arith.constant 0 : index
    %c0_0 = arith.constant 0 : index
    %0 = vector.load %arg1[%c0, %c0_0] : memref<16x32xf32, #tpu.memory_space<vmem>>, vector<16x32xf32>
    %c0_1 = arith.constant 0 : index
    %c0_2 = arith.constant 0 : index
    %1 = vector.load %arg2[%c0_1, %c0_2] : memref<32x256xf32, #tpu.memory_space<vmem>>, vector<32x256xf32>
    %cst = arith.constant dense<0.000000e+00> : vector<16x256xf32>
    %2 = tpu.matmul %0, %1, %cst {dimension_numbers = #tpu.dot_dimension_numbers<[1], [0], [0], [1], [0, 0, 1, 1], [], []>} : vector<16x32xf32>, vector<32x256xf32>, vector<16x256xf32> -> vector<16x256xf32>
    %c0_3 = arith.constant 0 : index
    %c0_4 = arith.constant 0 : index
    %3 = vector.load %arg3[%c0_3, %c0_4] : memref<1x256xf32, #tpu.memory_space<vmem>>, vector<1x256xf32>
    %4 = vector.broadcast %3 : vector<1x256xf32> to vector<16x256xf32>
    %5 = arith.addf %2, %4 : vector<16x256xf32>
    %6 = vector.extract_strided_slice %5 {offsets = [0, 0], sizes = [16, 32], strides = [1, 1]} : vector<16x256xf32> to vector<16x32xf32>
    %7 = vector.shape_cast %6 : vector<16x32xf32> to vector<1x16x32xf32>
    %8 = vector.extract_strided_slice %5 {offsets = [0, 128], sizes = [16, 32], strides = [1, 1]} : vector<16x256xf32> to vector<16x32xf32>
    %9 = vector.shape_cast %8 : vector<16x32xf32> to vector<1x16x32xf32>
    %cst_5 = arith.constant dense<0.000000e+00> : vector<1x16x16xf32>
    %10 = tpu.matmul %7, %9, %cst_5 {dimension_numbers = #tpu.dot_dimension_numbers<[2], [2], [1], [1], [0, 0, 0, 1, 1, 1], [0], [0]>} : vector<1x16x32xf32>, vector<1x16x32xf32>, vector<1x16x16xf32> -> vector<1x16x16xf32>
    %c0_6 = arith.constant 0 : index
    %c0_7 = arith.constant 0 : index
    %c0_8 = arith.constant 0 : index
    %11 = vector.load %arg4[%c0_6, %c0_7, %c0_8] : memref<1x16x16xf32, #tpu.memory_space<vmem>>, vector<1x16x16xf32>
    tpu.vector_store %arg4[%c0_6, %c0_7, %c0_8], %10 {strides = array<i32>} : memref<1x16x16xf32, #tpu.memory_space<vmem>>, vector<1x16x16xf32>,
    return
  }
  func.func @transform_0(%arg0: i32) -> (i32, i32) {
    %c0_i32 = arith.constant 0 : i32
    %c0_i32_0 = arith.constant 0 : i32
    return %arg0, %c0_i32 : i32, i32
  }
  func.func @transform_1(%arg0: i32) -> (i32, i32) {
    %c0_i32 = arith.constant 0 : i32
    %c0_i32_0 = arith.constant 0 : i32
    %c0_i32_1 = arith.constant 0 : i32
    return %c0_i32, %c0_i32_0 : i32, i32
  }
  func.func @transform_2(%arg0: i32) -> (i32, i32) {
    %c0_i32 = arith.constant 0 : i32
    %c0_i32_0 = arith.constant 0 : i32
    %c0_i32_1 = arith.constant 0 : i32
    return %c0_i32, %c0_i32_0 : i32, i32
  }
  func.func @transform_3(%arg0: i32) -> (i32, i32, i32) {
    %c0_i32 = arith.constant 0 : i32
    %c0_i32_0 = arith.constant 0 : i32
    %c0_i32_1 = arith.constant 0 : i32
    return %arg0, %c0_i32, %c0_i32_0 : i32, i32, i32
  }
}

</mosaic_0001>

<llo_original>
// kernel: tpu_custom_call.1
$region0: #{tpu_custom_call.1}
  #allocation0 [shape = 'u32[]', space=smem, size = 0x4, offset = 0x4, fixed_abs, tag = 'smem constant byte address 0x4 - core index']
  #allocation1 [shape = 'u32[144,128]{1,0:T(1,128)}', space=vmem, size = 0x12000, scoped, tag = 'internal scratch']
  %s0 = inlined_call_operand.hbm [shape: f32[32,32], index: 0, kind: input, shape index: {}]
  %s1 = inlined_call_operand.hbm [shape: f32[32,256], index: 1, kind: input, shape index: {}]
  %s2 = inlined_call_operand.vmem [shape: f32[1,256], index: 2, kind: input, shape index: {}]
  %s3 = inlined_call_operand.hbm [shape: f32[2,16,16], index: 3, kind: output, shape index: {}]
  %s4 = sld [smem:[#allocation0]]
  $region53: #{tpu_custom_call.1} parent=0
    _
  %s6 = ssub.s32 1, %s4
  %s7 = scalar_select 0, %s6, %s4
  $region1: #{tpu_custom_call.1} parent=0
    #allocation2 [shape = 'u8[16384]{0}', space=vmem, size = 0x4000, scoped, tag = 'input window, operand 0']
    #allocation3 [shape = 's32[2]{0}', space=sflag, size = 0x8, scoped, tag = 'scoped memory for tpu_custom_call.1']
    #allocation4 [shape = 's32[2]{0}', space=sflag, size = 0x8, scoped, tag = 'scoped memory for tpu_custom_call.1']
    #allocation5 [shape = 'u8[32768]{0}', space=vmem, size = 0x8000, scoped, tag = 'input window, operand 1, single buffered']
    #allocation6 [shape = 's32[1]{0}', space=sflag, size = 0x4, scoped, tag = 'scoped memory for tpu_custom_call.1']
    #allocation7 [shape = 'u8[16384]{0}', space=vmem, size = 0x4000, scoped, tag = 'output window, operand 0']
    %8 = vsyncpa [#allocation3], 0
    %s9 = scalar_lea.sflag [#allocation3], 1
    %10 = vsyncpa %s9, 0
    %11 = vsyncpa [#allocation6], 0
    %12 = vsyncpa [#allocation4], 0
    %s13 = scalar_lea.sflag [#allocation4], 1
    %14 = vsyncpa %s13, 0
    loop: start=0, step=1, limit=4
    $region2: #{tpu_custom_call.1} parent=1 // loop_pre_header
      _
    $region3: #{tpu_custom_call.1} parent=1 // loop_header
      %s16 = sphi 0, %s20
      %p17 = scmp.ge.s32.totalorder %s16, 4
      %s26 = sphi 0, %s28
      %s29 = sphi 0, %s26
      %s30 = sphi 0, %s29
      %s46 = sphi 0, %s30
      %s50 = sphi 0, %s50
      %s52 = sphi 0, %s50
      %s53 = sphi 0, %s52
      %s67 = sphi 0, %s53
      %s71 = sphi 0, %s71
      %s73 = sphi 0, %s71
      %s74 = sphi 0, %s73
      %s88 = sphi 0, %s74
      %s94 = sphi 0, %s96
      %s97 = sphi 0, %s94
      %s98 = sphi 0, %s97
      %s114 = sphi 0, %s98
    $region4: #{tpu_custom_call.1} parent=1 // loop_header_branch
      %19 = sbr.rel (%p17) target = $region8
    $region5: #{tpu_custom_call.1} parent=1 // loop_body
      %s21 = ssub.s32 %s16, 1
      %s22 = ssub.s32 %s16, 2
      %s23 = sadd.s32 %s16, 1
      %s24 = ssub.s32 %s16, %s23
      %p25 = scmp.eq.s32.totalorder %s24, 0
      %s27 = sadd.s32 %s26, 1
      %s28 = scalar_select %p25, %s26, %s27
      %p31 = pneg %p25
      %p32 = scmp.eq.s32.totalorder %s16, 1
      %p33 = por %p31, %p32
      %p34 = scmp.ne.s32.totalorder %s26, %s29
      %p35 = scmp.eq.s32.totalorder %s16, 0
      %p36 = por %p34, %p35
      %p37 = scmp.ne.s32.totalorder %s26, %s29
      %p38 = scmp.eq.s32.totalorder %s21, 1
      %p39 = por %p37, %p38
      %p40 = scmp.ne.s32.totalorder %s29, %s30
      %p41 = scmp.eq.s32.totalorder %s21, 0
      %p42 = por %p40, %p41
      %p43 = scmp.ne.s32.totalorder %s29, %s30
      %p44 = scmp.eq.s32.totalorder %s22, 1
      %p45 = por %p43, %p44
      %p47 = scmp.ne.s32.totalorder %s30, %s46
      %p48 = scmp.eq.s32.totalorder %s22, 0
      %p49 = por %p47, %p48
      %s51 = sadd.s32 %s50, 1
      %p54 = scmp.eq.s32.totalorder %s16, 1
      %p55 = scmp.ne.s32.totalorder %s50, %s52
      %p56 = scmp.eq.s32.totalorder %s16, 0
      %p57 = por %p55, %p56
      %p58 = scmp.ne.s32.totalorder %s50, %s52
      %p59 = scmp.eq.s32.totalorder %s21, 1
      %p60 = por %p58, %p59
      %p61 = scmp.ne.s32.totalorder %s52, %s53
      %p62 = scmp.eq.s32.totalorder %s21, 0
      %p63 = por %p61, %p62
      %p64 = scmp.ne.s32.totalorder %s52, %s53
      %p65 = scmp.eq.s32.totalorder %s22, 1
      %p66 = por %p64, %p65
      %p68 = scmp.ne.s32.totalorder %s53, %s67
      %p69 = scmp.eq.s32.totalorder %s22, 0
      %p70 = por %p68, %p69
      %s72 = sadd.s32 %s71, 1
      %p75 = scmp.eq.s32.totalorder %s16, 1
      %p76 = scmp.ne.s32.totalorder %s71, %s73
      %p77 = scmp.eq.s32.totalorder %s16, 0
      %p78 = por %p76, %p77
      %p79 = scmp.ne.s32.totalorder %s71, %s73
      %p80 = scmp.eq.s32.totalorder %s21, 1
      %p81 = por %p79, %p80
      %p82 = scmp.ne.s32.totalorder %s73, %s74
      %p83 = scmp.eq.s32.totalorder %s21, 0
      %p84 = por %p82, %p83
      %p85 = scmp.ne.s32.totalorder %s73, %s74
      %p86 = scmp.eq.s32.totalorder %s22, 1
      %p87 = por %p85, %p86
      %p89 = scmp.ne.s32.totalorder %s74, %s88
      %p90 = scmp.eq.s32.totalorder %s22, 0
      %p91 = por %p89, %p90
      %s92 = ssub.s32 %s16, %s23
      %p93 = scmp.eq.s32.totalorder %s92, 0
      %s95 = sadd.s32 %s94, 1
      %s96 = scalar_select %p93, %s94, %s95
      %p99 = pneg %p93
      %p100 = scmp.eq.s32.totalorder %s16, 1
      %p101 = por %p99, %p100
      %p102 = scmp.ne.s32.totalorder %s94, %s97
      %p103 = scmp.eq.s32.totalorder %s16, 0
      %p104 = por %p102, %p103
      %p105 = scmp.ne.s32.totalorder %s94, %s97
      %p106 = scmp.eq.s32.totalorder %s21, 1
      %p107 = por %p105, %p106
      %p108 = scmp.ne.s32.totalorder %s97, %s98
      %p109 = scmp.eq.s32.totalorder %s21, 0
      %p110 = por %p108, %p109
      %p111 = scmp.ne.s32.totalorder %s97, %s98
      %p112 = scmp.eq.s32.totalorder %s22, 1
      %p113 = por %p111, %p112
      %p115 = scmp.ne.s32.totalorder %s98, %s114
      %p116 = scmp.eq.s32.totalorder %s22, 0
      %p117 = por %p115, %p116
      %p118 = scmp.le.s32.totalorder 1, %s16
      %p119 = scmp.lt.s32.totalorder %s16, 3
      %p120 = pnand %p118, %p119
      %p121 = pneg %p120
      // Predicated region
      $region9: #{tpu_custom_call.1} parent=5 // pred_check
        _
      $region10: #{tpu_custom_call.1} parent=5 // pred_check_branch
        %123 = sbr.rel (%p120) target = $region12
      $region11: #{tpu_custom_call.1} parent=5 // pred_region
        %s124 = ssub.s32 %s16, 1
        // Predicated region
        $region13: #{tpu_custom_call.1} parent=11 // pred_check
          %p125 = pneg %p63
        $region14: #{tpu_custom_call.1} parent=11 // pred_check_branch
          %127 = sbr.rel (%p125) target = $region16
        $region15: #{tpu_custom_call.1} parent=11 // pred_region
          %s129 = ssub.s32 1024, 1024
          %130 = vsyncadd [#allocation6], %s129
          %s131 = sshll.u32 [#allocation5], 4
          %s132 = int_to_ptr.vmem [resolvable:$true] %s131
          %137 = dma.hbm_to_vmem [thread:$0]  %s1, 1024, %s132, [#allocation6], 256, 256, 16
        $region16: #{tpu_custom_call.1} parent=11 // pred_fallthru
          _
        // Predicated region
        $region17: #{tpu_custom_call.1} parent=11 // pred_check
          %p138 = pneg %p84
        $region18: #{tpu_custom_call.1} parent=11 // pred_check_branch
          %140 = sbr.rel (%p138) target = $region20
        $region19: #{tpu_custom_call.1} parent=11 // pred_region
          _
        $region20: #{tpu_custom_call.1} parent=11 // pred_fallthru
          _
      $region12: #{tpu_custom_call.1} parent=5 // pred_fallthru
        _
      %p141 = scmp.lt.s32.totalorder %s16, 2
      // Predicated region
      $region21: #{tpu_custom_call.1} parent=5 // pred_check
        %p142 = pneg %p141
      $region22: #{tpu_custom_call.1} parent=5 // pred_check_branch
        %144 = sbr.rel (%p142) target = $region24
      $region23: #{tpu_custom_call.1} parent=5 // pred_region
        // Predicated region
        $region25: #{tpu_custom_call.1} parent=23 // pred_check
          %p145 = pneg %p36
        $region26: #{tpu_custom_call.1} parent=23 // pred_check_branch
          %147 = sbr.rel (%p145) target = $region28
        $region27: #{tpu_custom_call.1} parent=23 // pred_region
          %s148 = sand.u32 %s26, 1
          %s149 = scalar_lea.sflag [#allocation3], %s148
          %s150 = sand.u32 %s26, 1
          %s151 = smul.addr %s150, 16
          %s152 = scalar_lea.vmem [#allocation2], %s151
          %s153 = smul.u32 2, %s16
          %s155 = ssub.s32 256, 256
          %156 = vsyncadd %s149, %s155
          %s157 = smul.addr %s153, 128
          %s158 = scalar_lea.hbm %s0, %s157
          %s159 = sshll.u32 %s152, 4
          %s160 = int_to_ptr.vmem [resolvable:$true] %s159
          %165 = dma.hbm_to_vmem [thread:$0]  %s158, 256, %s160, %s149, 128, 128, 8
        $region28: #{tpu_custom_call.1} parent=23 // pred_fallthru
          _
      $region24: #{tpu_custom_call.1} parent=5 // pred_fallthru
        _
      %p166 = scmp.le.s32.totalorder 1, %s16
      %p167 = scmp.lt.s32.totalorder %s16, 3
      %p168 = pnand %p166, %p167
      %p169 = pneg %p168
      // Predicated region
      $region29: #{tpu_custom_call.1} parent=5 // pred_check
        _
      $region30: #{tpu_custom_call.1} parent=5 // pred_check_branch
        %171 = sbr.rel (%p168) target = $region32
      $region31: #{tpu_custom_call.1} parent=5 // pred_region
        %s172 = ssub.s32 %s16, 1
        %s173 = sand.u32 %s29, 1
        %s174 = scalar_lea.sflag [#allocation3], %s173
        %s175 = sand.u32 %s29, 1
        %s176 = smul.addr %s175, 16
        %s177 = scalar_lea.vmem [#allocation2], %s176
        // Predicated region
        $region33: #{tpu_custom_call.1} parent=31 // pred_check
          %p178 = pneg %p42
        $region34: #{tpu_custom_call.1} parent=31 // pred_check_branch
          %180 = sbr.rel (%p178) target = $region36
        $region35: #{tpu_custom_call.1} parent=31 // pred_region
          %181 = dma.done %s174, 256
        $region36: #{tpu_custom_call.1} parent=31 // pred_fallthru
          _
        // Predicated region
        $region37: #{tpu_custom_call.1} parent=31 // pred_check
          %p182 = pneg %p63
        $region38: #{tpu_custom_call.1} parent=31 // pred_check_branch
          %184 = sbr.rel (%p182) target = $region40
        $region39: #{tpu_custom_call.1} parent=31 // pred_region
          %185 = dma.done [#allocation6], 1024
        $region40: #{tpu_custom_call.1} parent=31 // pred_fallthru
          _
        %s186 = sand.u32 %s29, 1
        %s187 = scalar_lea.sflag [#allocation3], %s186
        %s188 = sand.u32 %s29, 1
        %s189 = smul.addr %s188, 16
        %s190 = scalar_lea.vmem [#allocation2], %s189
        %p191 = pneg %p42
        %p192 = pneg %p39
        %p193 = pneg %p63
        %p194 = pneg %p60
        %p195 = pneg %p84
        %p196 = pneg %p81
        %p197 = pneg %p110
        %p198 = pneg %p107
        %s199 = sand.u32 %s97, 1
        %s200 = scalar_lea.sflag [#allocation4], %s199
        %s201 = sand.u32 %s97, 1
        %s202 = smul.addr %s201, 16
        %s203 = scalar_lea.vmem [#allocation7], %s202
        %s204 = smul.u32 2, %s21
        %v205 = vld [vmem:[%s177] sm:$0xff]
        %v206 = vld [vmem:[%s177 + $0x8] sm:$0xff]
        %v207 = vld [vmem:[#allocation5] sm:$0xff]
        %v208 = vld [vmem:[#allocation5 + $0x8] sm:$0xff]
        %v209 = vld [vmem:[#allocation5 + $0x10] sm:$0xff]
        %v210 = vld [vmem:[#allocation5 + $0x18] sm:$0xff]
        %v211 = vld [vmem:[#allocation5 + $0x20] sm:$0xff]
        %v212 = vld [vmem:[#allocation5 + $0x28] sm:$0xff]
        %v213 = vld [vmem:[#allocation5 + $0x30] sm:$0xff]
        %v214 = vld [vmem:[#allocation5 + $0x38] sm:$0xff]
        %v215 = vld [vmem:[%s2] sm:$0x3]
        %v217 = vlaneseq
        %v218 = vshrl.u32 %v217, 7
        %v219 = vsub.s32 0, %v218
        %v220 = vrot.slane %v215, %v219
        %v221 = vlaneseq
        %v222 = vshrl.u32 %v221, 7
        %v223 = vsub.s32 1, %v222
        %v224 = vrot.slane %v215, %v223
        %vm227 = vcmask 261120
        %v229 = vsel %vm227, %v205, 0
        %v232 = vsel %vm227, %v206, 0
        %234 = vmatprep.subr.mxu0 %v208
        %235 = vmatpush1.msra.mxu0 %v207
        %236 = vmatprep.subr.mxu0 %v210
        %237 = vmatpush1.msra.mxu0 %v209
        %238 = vmatprep.subr.mxu0 %v212
        %239 = vmatpush1.msra.mxu0 %v211
        %240 = vmatprep.subr.mxu0 %v214
        %241 = vmatpush1.msra.mxu0 %v213
        %242 = vmatprep.subr.mxu0 0.0
        %243 = vmatpush1.msra.mxu0 0.0
        %244 = vmatprep.subr.mxu0 0.0
        %245 = vmatpush1.msra.mxu0 0.0
        %246 = vmatprep.subr.mxu0 0.0
        %247 = vmatpush1.msra.mxu0 0.0
        %248 = vmatprep.subr.mxu0 0.0
        %249 = vmatpush1.msra.mxu0 0.0
        %250 = vmatprep.subr.mxu0 0.0
        %251 = vmatpush1.msra.mxu0 0.0
        %252 = vmatprep.subr.mxu0 0.0
        %253 = vmatpush1.msra.mxu0 0.0
        %254 = vmatprep.subr.mxu0 0.0
        %255 = vmatpush1.msra.mxu0 0.0
        %256 = vmatprep.subr.mxu0 0.0
        %257 = vmatpush1.msra.mxu0 0.0
        %258 = vmatprep.subr.mxu0 0.0
        %259 = vmatpush1.msra.mxu0 0.0
        %260 = vmatprep.subr.mxu0 0.0
        %261 = vmatpush1.msra.mxu0 0.0
        %262 = vmatprep.subr.mxu0 0.0
        %263 = vmatpush1.msra.mxu0 0.0
        %264 = vmatprep.subr.mxu0 0.0
        %265 = vmatpush1.msra.mxu0 0.0
        %266 = vmatprep.subr.mxu0 0.0
        %267 = vmatpush1.msra.mxu0 0.0
        %268 = vmatprep.subr.mxu0 0.0
        %269 = vmatpush1.msra.mxu0 0.0
        %270 = vmatprep.subr.mxu0 0.0
        %271 = vmatpush1.msra.mxu0 0.0
        %272 = vmatprep.subr.mxu0 0.0
        %273 = vmatpush1.msra.mxu0 0.0
        %274 = vmatprep.subr.mxu0 0.0
        %275 = vmatpush1.msra.mxu0 0.0
        %276 = vmatprep.subr.mxu0 0.0
        %277 = vmatpush1.msra.mxu0 0.0
        %278 = vmatprep.subr.mxu0 0.0
        %279 = vmatpush1.msra.mxu0 0.0
        %280 = vmatprep.subr.mxu0 0.0
        %281 = vmatpush1.msra.mxu0 0.0
        %282 = vmatprep.subr.mxu0 0.0
        %283 = vmatpush1.msra.mxu0 0.0
        %284 = vmatprep.subr.mxu0 0.0
        %285 = vmatpush1.msra.mxu0 0.0
        %286 = vmatprep.subr.mxu0 0.0
        %287 = vmatpush1.msra.mxu0 0.0
        %288 = vmatprep.subr.mxu0 0.0
        %289 = vmatpush1.msra.mxu0 0.0
        %290 = vmatprep.subr.mxu0 0.0
        %291 = vmatpush1.msra.mxu0 0.0
        %292 = vmatprep.subr.mxu0 0.0
        %293 = vmatpush1.msra.mxu0 0.0
        %294 = vmatprep.subr.mxu0 0.0
        %295 = vmatpush1.msra.mxu0 0.0
        %296 = vmatprep.subr.mxu0 0.0
        %297 = vmatpush1.msra.mxu0 0.0
        %298 = vmatprep.mubr.f32.mxu0 0.0
        %299 = vmatmul.mubr.f32.gmra.mrb[0].mxu0 %v229
        %v300 = vpop.f32.mrb[0].mxu0
        %v301 = vadd.f32 %v220, %v300
        %v302 = vpop.f32.mrb[0].mxu0
        %v303 = vadd.f32 %v224, %v302
        %304 = vmatprep.mubr.f32.mxu0 0.0
        %305 = vmatmul.mubr.f32.gmra.mrb[0].mxu0 %v232
        %v306 = vpop.f32.mrb[0].mxu0
        %v307 = vadd.f32 %v220, %v306
        %v308 = vpop.f32.mrb[0].mxu0
        %v309 = vadd.f32 %v224, %v308
        %310 = vdwg.mxu0
        %v312 = vsel %vm227, %v301, 0
        %v315 = vsel %vm227, %v307, 0
        %v318 = vsel %vm227, %v303, 0
        %v321 = vsel %vm227, %v309, 0
        %323 = vmatprep.subr.mxu0 0.0
        %324 = vmatpush1.xpose.msra.mxu0 %v318
        %325 = vmatprep.subr.mxu0 0.0
        %326 = vmatpush1.xpose.msra.mxu0 %v321
        %327 = vmatprep.subr.mxu0 0.0
        %328 = vmatpush1.xpose.msra.mxu0 0.0
        %329 = vmatprep.subr.mxu0 0.0
        %330 = vmatpush1.xpose.msra.mxu0 0.0
        %331 = vmatprep.subr.mxu0 0.0
        %332 = vmatpush1.xpose.msra.mxu0 0.0
        %333 = vmatprep.subr.mxu0 0.0
        %334 = vmatpush1.xpose.msra.mxu0 0.0
        %335 = vmatprep.subr.mxu0 0.0
        %336 = vmatpush1.xpose.msra.mxu0 0.0
        %337 = vmatprep.subr.mxu0 0.0
        %338 = vmatpush1.xpose.msra.mxu0 0.0
        %339 = vmatprep.subr.mxu0 0.0
        %340 = vmatpush1.xpose.msra.mxu0 0.0
        %341 = vmatprep.subr.mxu0 0.0
        %342 = vmatpush1.xpose.msra.mxu0 0.0
        %343 = vmatprep.subr.mxu0 0.0
        %344 = vmatpush1.xpose.msra.mxu0 0.0
        %345 = vmatprep.subr.mxu0 0.0
        %346 = vmatpush1.xpose.msra.mxu0 0.0
        %347 = vmatprep.subr.mxu0 0.0
        %348 = vmatpush1.xpose.msra.mxu0 0.0
        %349 = vmatprep.subr.mxu0 0.0
        %350 = vmatpush1.xpose.msra.mxu0 0.0
        %351 = vmatprep.subr.mxu0 0.0
        %352 = vmatpush1.xpose.msra.mxu0 0.0
        %353 = vmatprep.subr.mxu0 0.0
        %354 = vmatpush1.xpose.msra.mxu0 0.0
        %355 = vmatprep.subr.mxu0 0.0
        %356 = vmatpush1.xpose.msra.mxu0 0.0
        %357 = vmatprep.subr.mxu0 0.0
        %358 = vmatpush1.xpose.msra.mxu0 0.0
        %359 = vmatprep.subr.mxu0 0.0
        %360 = vmatpush1.xpose.msra.mxu0 0.0
        %361 = vmatprep.subr.mxu0 0.0
        %362 = vmatpush1.xpose.msra.mxu0 0.0
        %363 = vmatprep.subr.mxu0 0.0
        %364 = vmatpush1.xpose.msra.mxu0 0.0
        %365 = vmatprep.subr.mxu0 0.0
        %366 = vmatpush1.xpose.msra.mxu0 0.0
        %367 = vmatprep.subr.mxu0 0.0
        %368 = vmatpush1.xpose.msra.mxu0 0.0
        %369 = vmatprep.subr.mxu0 0.0
        %370 = vmatpush1.xpose.msra.mxu0 0.0
        %371 = vmatprep.subr.mxu0 0.0
        %372 = vmatpush1.xpose.msra.mxu0 0.0
        %373 = vmatprep.subr.mxu0 0.0
        %374 = vmatpush1.xpose.msra.mxu0 0.0
        %375 = vmatprep.subr.mxu0 0.0
        %376 = vmatpush1.xpose.msra.mxu0 0.0
        %377 = vmatprep.subr.mxu0 0.0
        %378 = vmatpush1.xpose.msra.mxu0 0.0
        %379 = vmatprep.subr.mxu0 0.0
        %380 = vmatpush1.xpose.msra.mxu0 0.0
        %381 = vmatprep.subr.mxu0 0.0
        %382 = vmatpush1.xpose.msra.mxu0 0.0
        %383 = vmatprep.subr.mxu0 0.0
        %384 = vmatpush1.xpose.msra.mxu0 0.0
        %385 = vmatprep.subr.mxu0 0.0
        %386 = vmatpush1.xpose.msra.mxu0 0.0
        %387 = vmatprep.mubr.f32.mxu0 0.0
        %388 = vmatmul.mubr.f32.gmra.mrb[0].mxu0 %v312
        %v389 = vpop.f32.mrb[0].mxu0
        %v390 = vadd.f32 0.0, %v389
        %v391 = vpop.f32.mrb[0].mxu0
        %392 = vmatprep.mubr.f32.mxu0 0.0
        %393 = vmatmul.mubr.f32.gmra.mrb[0].mxu0 %v315
        %v394 = vpop.f32.mrb[0].mxu0
        %v395 = vadd.f32 0.0, %v394
        %v396 = vpop.f32.mrb[0].mxu0
        %397 = vdwg.mxu0
        %vm398 = vcmask 130048
        %399 = vst.msk [vmem:[%s203] sm:$0xff] %vm398, %v390
        %400 = vst.msk [vmem:[%s203 + $0x8] sm:$0xff] %vm398, %v395
        %s401 = sand.u32 %s97, 1
        %s402 = scalar_lea.sflag [#allocation4], %s401
        %s403 = sand.u32 %s97, 1
        %s404 = smul.addr %s403, 16
        %s405 = scalar_lea.vmem [#allocation7], %s404
        // Predicated region
        $region41: #{tpu_custom_call.1} parent=31 // pred_check
          %p406 = pneg %p107
        $region42: #{tpu_custom_call.1} parent=31 // pred_check_branch
          %408 = sbr.rel (%p406) target = $region44
        $region43: #{tpu_custom_call.1} parent=31 // pred_region
          %s410 = ssub.s32 256, 256
          %411 = vsyncadd %s402, %s410
          %s412 = smul.addr %s21, 2
          %s413 = smul.addr %s412, 128
          %s414 = scalar_lea.hbm %s3, %s413
          %s415 = sshll.u32 %s405, 4
          %s416 = int_to_ptr.vmem [resolvable:$true] %s415
          %421 = dma.vmem_to_hbm [thread:$0]  %s416, 256, %s414, %s402, 128, 128, 8
        $region44: #{tpu_custom_call.1} parent=31 // pred_fallthru
          _
      $region32: #{tpu_custom_call.1} parent=5 // pred_fallthru
        _
      %p422 = scmp.le.s32.totalorder 2, %s16
      // Predicated region
      $region45: #{tpu_custom_call.1} parent=5 // pred_check
        %p423 = pneg %p422
      $region46: #{tpu_custom_call.1} parent=5 // pred_check_branch
        %425 = sbr.rel (%p423) target = $region48
      $region47: #{tpu_custom_call.1} parent=5 // pred_region
        %s426 = ssub.s32 %s16, 2
        // Predicated region
        $region49: #{tpu_custom_call.1} parent=47 // pred_check
          %p427 = pneg %p113
        $region50: #{tpu_custom_call.1} parent=47 // pred_check_branch
          %429 = sbr.rel (%p427) target = $region52
        $region51: #{tpu_custom_call.1} parent=47 // pred_region
          %s430 = sand.u32 %s98, 1
          %s431 = scalar_lea.sflag [#allocation4], %s430
          %s432 = sand.u32 %s98, 1
          %s433 = smul.addr %s432, 16
          %s434 = scalar_lea.vmem [#allocation7], %s433
          %435 = dma.done %s431, 256
        $region52: #{tpu_custom_call.1} parent=47 // pred_fallthru
          _
      $region48: #{tpu_custom_call.1} parent=5 // pred_fallthru
        _
    $region6: #{tpu_custom_call.1} parent=1 // loop_footer
      %s20 = sadd.s32 1, %s16
    $region7: #{tpu_custom_call.1} parent=1 // loop_footer_branch
      %15 = sbr.rel target = $region3
    $region8: #{tpu_custom_call.1} parent=1 // loop_exit
      _
    %436 = vsyncpa [#allocation3], 1
    %s437 = scalar_lea.sflag [#allocation3], 1
    %438 = vsyncpa %s437, 1
    %439 = vsyncpa [#allocation6], 1
    %440 = vsyncpa [#allocation4], 1
    %s441 = scalar_lea.sflag [#allocation4], 1
    %442 = vsyncpa %s441, 1

</llo_original>
